<compile_context>
chip_gen: v5e
topology: v5e:2x2
jax: 0.10.0
libtpu: 0.0.40
codegen_flags: <defaults>
</compile_context>

<pallas_src>
import math

import jax
import jax.numpy as jnp
from jax import lax
from jax.experimental import pallas as pl
from jax.experimental.pallas import tpu as pltpu

_LANE = 128
# 48 MiB: safe on v7x (64 MiB physical per TC) while being plenty for the tiny blocks here.
_VMEM_LIMIT = 48 * 1024 * 1024


def _round_up(x, m):
    return (x + m - 1) // m * m


def _pick_tile(dim, candidates):
    for c in candidates:
        if dim % c == 0:
            return c
    return dim  # fallback: full extent (block dim == full array dim is always legal)


# ---------------------------------------------------------------------------
# Kernel 1: fc1 — resident-weight fused linear  (x @ W + b), bf16 MXU, f32 acc
# ---------------------------------------------------------------------------
def _linear_kernel(x_ref, w_ref, b_ref, o_ref):
    acc = jnp.dot(x_ref[...].astype(jnp.bfloat16), w_ref[...],
                  preferred_element_type=jnp.float32)
    o_ref[...] = (acc + b_ref[...].astype(jnp.float32)).astype(o_ref.dtype)


def linear(x2d, w, b, out_dtype):
    """x2d: (M, K) any float dtype, w: (K, N) bf16, b: (N,) f32.  N multiple of 128."""
    M, K = x2d.shape
    K2, N = w.shape
    assert K == K2 and N % _LANE == 0

    # Resident-weight path: the whole (K, N) weight lives in VMEM; single grid axis over
    # M rows.  Fine for SegFormer-size weights (a few MiB in bf16).
    # TODO(synk): add a K/N-tiled 3-D grid fallback for weights too large for VMEM.
    Mp = _round_up(M, _LANE)
    tm = _pick_tile(Mp, (512, 256, 128))
    xp = jnp.pad(x2d, ((0, Mp - M), (0, 0))) if Mp != M else x2d

    out = pl.pallas_call(
        _linear_kernel,
        out_shape=jax.ShapeDtypeStruct((Mp, N), out_dtype),
        grid_spec=pltpu.PrefetchScalarGridSpec(
            num_scalar_prefetch=0,
            grid=(Mp // tm,),
            in_specs=[
                pl.BlockSpec((tm, K), lambda i: (i, 0)),
                pl.BlockSpec((K, N), lambda i: (0, 0)),   # weight: VMEM-resident
                pl.BlockSpec((1, N), lambda i: (0, 0)),
            ],
            out_specs=pl.BlockSpec((tm, N), lambda i: (i, 0)),
        ),
        compiler_params=pltpu.CompilerParams(
            dimension_semantics=("parallel",),
            vmem_limit_bytes=_VMEM_LIMIT,
        ),
    )(xp, w, b.reshape(1, N))

    return out[:M] if Mp != M else out


# ---------------------------------------------------------------------------
# Kernel 2: fused depthwise 3x3 conv (stride 1, pad 1, groups=C) + bias + exact GELU
#           + fc2 (x @ W2 + b2).
# Grid = (batch, hidden-channel tile); the channel axis is the fc2 reduction axis.
# Halo handling: W (sublane) shifts via pltpu.roll + iota edge masks, H shifts via
# outer-dim slicing — no padded scratch, no full-tile zero fill.
# ---------------------------------------------------------------------------
def _dwconv_gelu_fc2_kernel(x_ref, wd_ref, bd_ref, w2_ref, b2_ref, o_ref, acc_ref):
    # x_ref : (1, H, W, tc)      bf16  fc1-output tile (one batch, one channel tile)
    # wd_ref: (9, tc)            f32   depthwise taps, row-major over the 3x3 window
    # bd_ref: (1, tc)            f32
    # w2_ref: (tc, Co)           bf16  fc2 weight slab for this channel tile
    # b2_ref: (1, Co)            f32
    # o_ref : (1, H*W, Co)
    # acc_ref: (H*W, Co)         f32   fc2 accumulator (resident across channel tiles)
    ci = pl.program_id(1)

    @pl.when(ci == 0)
    def _():
        acc_ref[...] = jnp.zeros_like(acc_ref)

    x = x_ref[0].astype(jnp.float32)          # (H, W, C)
    H, W, C = x.shape
    wd = wd_ref[...].astype(jnp.float32)      # (9, C)
    bd = bd_ref[0].astype(jnp.float32)        # (C,)

    col = lax.broadcasted_iota(jnp.int32, (H, W, C), 1)

    def shift_w(arr, s):
        # result[:, w, :] = arr[:, w + s, :] with zero fill outside the image.
        if s == 0:
            return arr
        r = pltpu.roll(arr, shift=(-s) % W, axis=1)   # XLU sublane rotate
        if s == 1:
            return jnp.where(col < (W - 1), r, 0.0)
        return jnp.where(col >= 1, r, 0.0)

    def shift_h(arr, s):
        # result[h, :, :] = arr[h + s, :, :] with zero fill outside the image.
        if s == 0:
            return arr
        zrow = jnp.zeros((1, W, C), arr.dtype)
        if s == 1:
            return jnp.concatenate([arr[1:], zrow], axis=0)
        return jnp.concatenate([zrow, arr[:-1]], axis=0)

    conv = jnp.zeros((H, W, C), jnp.float32)
    for dx in (-1, 0, 1):
        xs = shift_w(x, dx)
        for dy in (-1, 0, 1):
            tap = wd[(dy + 1) * 3 + (dx + 1), :]      # (C,), broadcasts over H, W
            conv = conv + shift_h(xs, dy) * tap

    conv = conv + bd
    # Exact (erf-based) GELU, matching PyTorch nn.GELU default.
    g = 0.5 * conv * (1.0 + lax.erf(conv * jnp.float32(0.7071067811865476)))
    g = g.reshape(H * W, C).astype(jnp.bfloat16)

    # fc2 partial product for this channel tile (bf16 MXU, f32 accumulate).
    acc_ref[...] += jnp.dot(g, w2_ref[...], preferred_element_type=jnp.float32)

    @pl.when(ci == pl.num_programs(1) - 1)
    def _():
        o_ref[0] = (acc_ref[...] + b2_ref[...].astype(jnp.float32)).astype(o_ref.dtype)


def dwconv_gelu_fc2(x_nhwc, wd, bd, w2, b2, out_dtype):
    """x_nhwc: (B, H, W, Ch) bf16, Ch mult of 128. wd: (9, Ch) f32, bd: (Ch,) f32,
    w2: (Ch, Co) bf16 (Co mult of 128), b2: (Co,) f32.  Returns (B, H*W, Co)."""
    B, H, W, Ch = x_nhwc.shape
    Ch2, Co = w2.shape
    assert Ch == Ch2 and Ch % _LANE == 0 and Co % _LANE == 0
    tc = _LANE
    N = H * W
    # TODO(synk): for very large H*W (stage-1 SegFormer) additionally tile rows with a
    # 1-row halo so the per-step spatial block + accumulator stay under the v7x budget.

    return pl.pallas_call(
        _dwconv_gelu_fc2_kernel,
        out_shape=jax.ShapeDtypeStruct((B, N, Co), out_dtype),
        grid_spec=pltpu.PrefetchScalarGridSpec(
            num_scalar_prefetch=0,
            grid=(B, Ch // tc),
            in_specs=[
                pl.BlockSpec((1, H, W, tc), lambda b, c: (b, 0, 0, c)),
                pl.BlockSpec((9, tc), lambda b, c: (0, c)),
                pl.BlockSpec((1, tc), lambda b, c: (0, c)),
                pl.BlockSpec((tc, Co), lambda b, c: (c, 0)),
                pl.BlockSpec((1, Co), lambda b, c: (0, 0)),
            ],
            out_specs=pl.BlockSpec((1, N, Co), lambda b, c: (b, 0, 0)),
            scratch_shapes=[pltpu.VMEM((N, Co), jnp.float32)],
        ),
        compiler_params=pltpu.CompilerParams(
            dimension_semantics=("parallel", "arbitrary"),
            vmem_limit_bytes=_VMEM_LIMIT,
        ),
    )(x_nhwc, wd, bd.reshape(1, Ch), w2, b2.reshape(1, Co))


# ---------------------------------------------------------------------------
# Full Mlp forward
# ---------------------------------------------------------------------------
def mlp_forward(x, params, H, W):
    """x: (B, N, C_in) with N = H*W (row-major: n = h*W + w)."""
    w1, b1, wd, bd, w2, b2 = params
    B, N, Cin = x.shape
    assert N == H * W
    hidden = w1.shape[1]
    Cout = w2.shape[1]

    hid_p = _round_up(hidden, _LANE)
    cout_p = _round_up(Cout, _LANE)

    # Weight prep: pad hidden / Cout to lane multiples (lane-dense blocks) and cast the
    # matmul weights to bf16.  In a real model this is done once at init, not per call.
    w1p = jnp.pad(w1, ((0, 0), (0, hid_p - hidden))).astype(jnp.bfloat16)
    b1p = jnp.pad(b1, (0, hid_p - hidden)).astype(jnp.float32)
    wdp = jnp.pad(wd, ((0, 0), (0, hid_p - hidden))).astype(jnp.float32)
    bdp = jnp.pad(bd, (0, hid_p - hidden)).astype(jnp.float32)
    w2p = jnp.pad(w2, ((0, hid_p - hidden), (0, cout_p - Cout))).astype(jnp.bfloat16)
    b2p = jnp.pad(b2, (0, cout_p - Cout)).astype(jnp.float32)

    M = B * N
    # fc1: bf16 MXU, bf16 output (halves HBM traffic of the hidden tensor).
    h = linear(x.reshape(M, Cin), w1p, b1p, out_dtype=jnp.bfloat16)   # (M, hid_p)
    h = h.reshape(B, H, W, hid_p)
    # dwconv (NHWC) + bias + exact GELU + fc2, fused.  Dropout p=0.0 -> identity.
    y = dwconv_gelu_fc2(h, wdp, bdp, w2p, b2p, out_dtype=x.dtype)     # (B, N, cout_p)
    return y[:, :, :Cout]


# ---------------------------------------------------------------------------
# Deterministic parameter init (mirrors Mlp._init_weights)
# ---------------------------------------------------------------------------
def init_params(key, in_features, hidden_features, out_features):
    k1, k2, k3 = jax.random.split(key, 3)
    std = 0.02
    # Linear weights: trunc normal (std=0.02), bias = 0.  Stored as (in, out)
    # so kernels compute x @ W (equivalent to PyTorch x @ weight.T).
    w1 = std * jax.random.truncated_normal(
        k1, -2.0, 2.0, (in_features, hidden_features), jnp.float32)
    b1 = jnp.zeros((hidden_features,), jnp.float32)
    # Depthwise conv: normal(0, sqrt(2/fan_out)), fan_out = 3*3*C/groups = 9.
    wd = math.sqrt(2.0 / 9.0) * jax.random.normal(
        k2, (9, hidden_features), jnp.float32)            # (3*3, C) row-major taps
    bd = jnp.zeros((hidden_features,), jnp.float32)
    w2 = std * jax.random.truncated_normal(
        k3, -2.0, 2.0, (hidden_features, out_features), jnp.float32)
    b2 = jnp.zeros((out_features,), jnp.float32)
    return (w1, b1, wd, bd, w2, b2)


# ---------------------------------------------------------------------------
# Pure-JAX f32 reference (sanity check for the Pallas path)
# ---------------------------------------------------------------------------
def mlp_reference(x, params, H, W):
    w1, b1, wd, bd, w2, b2 = params
    B, N, _ = x.shape
    hid = w1.shape[1]
    h = x @ w1 + b1
    himg = h.reshape(B, H, W, hid)
    hp = jnp.pad(himg, ((0, 0), (1, 1), (1, 1), (0, 0)))
    acc = jnp.zeros((B, H, W, hid), jnp.float32)
    for dy in range(3):
        for dx in range(3):
            acc = acc + hp[:, dy:dy + H, dx:dx + W, :].astype(jnp.float32) * wd[dy * 3 + dx]
    acc = acc + bd
    g = 0.5 * acc * (1.0 + lax.erf(acc * jnp.float32(0.7071067811865476)))
    g = g.reshape(B, N, hid)
    return g @ w2 + b2


if __name__ == "__main__":
    B, H, W = 2, 8, 8
    N = H * W
    in_features, hidden_features = 16, 32
    out_features = in_features

    key = jax.random.PRNGKey(0)
    kp, kx = jax.random.split(key)
    params = init_params(kp, in_features, hidden_features, out_features)
    x = jax.random.normal(kx, (B, N, in_features), jnp.float32)

    out = mlp_forward(x, params, H, W)
    out = jax.block_until_ready(out)
    assert out.shape == (B, N, out_features)
    assert bool(jnp.all(jnp.isfinite(out)))

    ref = mlp_reference(x, params, H, W)
    max_err = float(jnp.max(jnp.abs(out - ref)))
    # bf16 matmul operands + bf16 hidden activation vs. an all-f32 reference.
    assert max_err < 5e-3, f"mismatch vs reference: {max_err}"

    print("KERNEL_OK")
</pallas_src>

<mosaic_0001>
module attributes {stable_mosaic.version = 11 : i64} {
  func.func @_linear_kernel(%arg0: i32, %arg1: memref<128x16xf32, #tpu.memory_space<vmem>>, %arg2: memref<16x128xbf16, #tpu.memory_space<vmem>>, %arg3: memref<1x128xf32, #tpu.memory_space<vmem>>, %arg4: memref<128x128xbf16, #tpu.memory_space<vmem>>) attributes {dimension_semantics = [#tpu.dimension_semantics<parallel>], iteration_bounds = array<i64: 1>, scalar_prefetch = 0 : i64, scratch_operands = 0 : i64, tpu.core_type = #tpu.core_type<tc>, window_params = [{transform_indices = @transform_0, window_bounds = array<i64: 128, 16>}, {pipeline_mode = #tpu.pipeline_mode<synchronous>, transform_indices = @transform_1, window_bounds = array<i64: 16, 128>}, {pipeline_mode = #tpu.pipeline_mode<synchronous>, transform_indices = @transform_2, window_bounds = array<i64: 1, 128>}, {transform_indices = @transform_3, window_bounds = array<i64: 128, 128>}]} {
    %c0 = arith.constant 0 : index
    %c0_0 = arith.constant 0 : index
    %0 = vector.load %arg1[%c0, %c0_0] : memref<128x16xf32, #tpu.memory_space<vmem>>, vector<128x16xf32>
    %1 = arith.truncf %0 : vector<128x16xf32> to vector<128x16xbf16>
    %c0_1 = arith.constant 0 : index
    %c0_2 = arith.constant 0 : index
    %2 = vector.load %arg2[%c0_1, %c0_2] : memref<16x128xbf16, #tpu.memory_space<vmem>>, vector<16x128xbf16>
    %cst = arith.constant dense<0.000000e+00> : vector<128x128xf32>
    %3 = tpu.matmul %1, %2, %cst {dimension_numbers = #tpu.dot_dimension_numbers<[1], [0], [0], [1], [0, 0, 1, 1], [], []>} : vector<128x16xbf16>, vector<16x128xbf16>, vector<128x128xf32> -> vector<128x128xf32>
    %c0_3 = arith.constant 0 : index
    %c0_4 = arith.constant 0 : index
    %4 = vector.load %arg3[%c0_3, %c0_4] : memref<1x128xf32, #tpu.memory_space<vmem>>, vector<1x128xf32>
    %5 = vector.broadcast %4 : vector<1x128xf32> to vector<128x128xf32>
    %6 = arith.addf %3, %5 : vector<128x128xf32>
    %7 = arith.truncf %6 : vector<128x128xf32> to vector<128x128xbf16>
    %c0_5 = arith.constant 0 : index
    %c0_6 = arith.constant 0 : index
    %8 = vector.load %arg4[%c0_5, %c0_6] : memref<128x128xbf16, #tpu.memory_space<vmem>>, vector<128x128xbf16>
    tpu.vector_store %arg4[%c0_5, %c0_6], %7 {strides = array<i32>} : memref<128x128xbf16, #tpu.memory_space<vmem>>, vector<128x128xbf16>,
    return
  }
  func.func @transform_0(%arg0: i32) -> (i32, i32) {
    %c0_i32 = arith.constant 0 : i32
    %c0_i32_0 = arith.constant 0 : i32
    return %arg0, %c0_i32 : i32, i32
  }
  func.func @transform_1(%arg0: i32) -> (i32, i32) {
    %c0_i32 = arith.constant 0 : i32
    %c0_i32_0 = arith.constant 0 : i32
    %c0_i32_1 = arith.constant 0 : i32
    return %c0_i32, %c0_i32_0 : i32, i32
  }
  func.func @transform_2(%arg0: i32) -> (i32, i32) {
    %c0_i32 = arith.constant 0 : i32
    %c0_i32_0 = arith.constant 0 : i32
    %c0_i32_1 = arith.constant 0 : i32
    return %c0_i32, %c0_i32_0 : i32, i32
  }
  func.func @transform_3(%arg0: i32) -> (i32, i32) {
    %c0_i32 = arith.constant 0 : i32
    %c0_i32_0 = arith.constant 0 : i32
    return %arg0, %c0_i32 : i32, i32
  }
}

</mosaic_0001>

<llo_original>
// kernel: tpu_custom_call.1
$region0: #{tpu_custom_call.1}
  #allocation0 [shape = 'u32[]', space=smem, size = 0x4, offset = 0x4, fixed_abs, tag = 'smem constant byte address 0x4 - core index']
  #allocation1 [shape = 'u32[72,128]{1,0:T(1,128)}', space=vmem, size = 0x9000, scoped, tag = 'internal scratch']
  %s0 = inlined_call_operand.vmem [shape: f32[128,16], index: 0, kind: input, shape index: {}]
  %s1 = inlined_call_operand.vmem [shape: bf16[16,128], index: 1, kind: input, shape index: {}]
  %s2 = inlined_call_operand.vmem [shape: f32[1,128], index: 2, kind: input, shape index: {}]
  %s3 = inlined_call_operand.hbm [shape: bf16[128,128], index: 3, kind: output, shape index: {}]
  %s4 = sld [smem:[#allocation0]]
  $region22: #{tpu_custom_call.1} parent=0
    _
  %s6 = ssub.s32 1, %s4
  %s7 = scalar_select 0, %s6, %s4
  $region1: #{tpu_custom_call.1} parent=0
    #allocation2 [shape = 'u8[32768]{0}', space=vmem, size = 0x8000, scoped, tag = 'output window, operand 0, single buffered']
    #allocation3 [shape = 's32[1]{0}', space=sflag, size = 0x4, scoped, tag = 'scoped memory for tpu_custom_call.1']
    %8 = vsyncpa [#allocation3], 0
    // Predicated region
    $region2: #{tpu_custom_call.1} parent=1 // pred_check
      _
    $region3: #{tpu_custom_call.1} parent=1 // pred_check_branch
      %10 = sbr.rel (0) target = $region5
    $region4: #{tpu_custom_call.1} parent=1 // pred_region
      _
    $region5: #{tpu_custom_call.1} parent=1 // pred_fallthru
      _
    // Predicated region
    $region6: #{tpu_custom_call.1} parent=1 // pred_check
      _
    $region7: #{tpu_custom_call.1} parent=1 // pred_check_branch
      %12 = sbr.rel (0) target = $region9
    $region8: #{tpu_custom_call.1} parent=1 // pred_region
      _
    $region9: #{tpu_custom_call.1} parent=1 // pred_fallthru
      _
    // Predicated region
    $region10: #{tpu_custom_call.1} parent=1 // pred_check
      _
    $region11: #{tpu_custom_call.1} parent=1 // pred_check_branch
      %14 = sbr.rel (0) target = $region13
    $region12: #{tpu_custom_call.1} parent=1 // pred_region
      _
    $region13: #{tpu_custom_call.1} parent=1 // pred_fallthru
      _
    %v16 = vld [vmem:[%s0] sm:$0xff]
    %v17 = vld [vmem:[%s0 + $0x8] sm:$0xff]
    %v18 = vld [vmem:[%s0 + $0x10] sm:$0xff]
    %v19 = vld [vmem:[%s0 + $0x18] sm:$0xff]
    %v20 = vld [vmem:[%s0 + $0x20] sm:$0xff]
    %v21 = vld [vmem:[%s0 + $0x28] sm:$0xff]
    %v22 = vld [vmem:[%s0 + $0x30] sm:$0xff]
    %v23 = vld [vmem:[%s0 + $0x38] sm:$0xff]
    %v24 = vld [vmem:[%s0 + $0x40] sm:$0xff]
    %v25 = vld [vmem:[%s0 + $0x48] sm:$0xff]
    %v26 = vld [vmem:[%s0 + $0x50] sm:$0xff]
    %v27 = vld [vmem:[%s0 + $0x58] sm:$0xff]
    %v28 = vld [vmem:[%s0 + $0x60] sm:$0xff]
    %v29 = vld [vmem:[%s0 + $0x68] sm:$0xff]
    %v30 = vld [vmem:[%s0 + $0x70] sm:$0xff]
    %v31 = vld [vmem:[%s0 + $0x78] sm:$0xff]
    %v32 = vpack.c.bf16 %v17, %v16
    %v33 = vpack.c.bf16 %v19, %v18
    %v34 = vpack.c.bf16 %v21, %v20
    %v35 = vpack.c.bf16 %v23, %v22
    %v36 = vpack.c.bf16 %v25, %v24
    %v37 = vpack.c.bf16 %v27, %v26
    %v38 = vpack.c.bf16 %v29, %v28
    %v39 = vpack.c.bf16 %v31, %v30
    %v40 = vld [vmem:[%s1] sm:$0xf]
    %v41 = vld [vmem:[%s1 + $0x4] sm:$0xf]
    %v42 = vld [vmem:[%s2] sm:$0x1]
    %v44 = vperm.slane %v42, 0
    %v48 = vunpack.c.l.b16 %v40
    %v49 = vunpack.c.l.b16 %v41
    %v50 = vpack.c.b16 %v49, %v48
    %vm52 = vcmask 130048
    %v54 = vsel %vm52, %v32, 0
    %v57 = vsel %vm52, %v33, 0
    %v60 = vsel %vm52, %v34, 0
    %v63 = vsel %vm52, %v35, 0
    %v66 = vsel %vm52, %v36, 0
    %v69 = vsel %vm52, %v37, 0
    %v72 = vsel %vm52, %v38, 0
    %v75 = vsel %vm52, %v39, 0
    %77 = vmatpush.bf16.msra.mxu0 0
    %78 = vmatpush.bf16.msra.mxu0 0
    %79 = vmatpush.bf16.msra.mxu0 0
    %80 = vmatpush.bf16.msra.mxu0 0
    %81 = vmatpush.bf16.msra.mxu0 0
    %82 = vmatpush.bf16.msra.mxu0 0
    %83 = vmatpush.bf16.msra.mxu0 0
    %84 = vmatpush.bf16.msra.mxu0 %v50
    %85 = vmatmul.bf16.gmra.mxu0 %v54
    %v86 = vpop.f32.mrf.mxu0
    %v87 = vadd.f32 %v44, %v86
    %v88 = vpop.f32.mrf.mxu0
    %v89 = vadd.f32 %v44, %v88
    %90 = vmatmul.bf16.gmra.mxu0 %v57
    %v91 = vpop.f32.mrf.mxu0
    %v92 = vadd.f32 %v44, %v91
    %v93 = vpop.f32.mrf.mxu0
    %v94 = vadd.f32 %v44, %v93
    %95 = vmatmul.bf16.gmra.mxu0 %v60
    %v96 = vpop.f32.mrf.mxu0
    %v97 = vadd.f32 %v44, %v96
    %v98 = vpop.f32.mrf.mxu0
    %v99 = vadd.f32 %v44, %v98
    %100 = vmatmul.bf16.gmra.mxu0 %v63
    %v101 = vpop.f32.mrf.mxu0
    %v102 = vadd.f32 %v44, %v101
    %v103 = vpop.f32.mrf.mxu0
    %v104 = vadd.f32 %v44, %v103
    %105 = vmatmul.bf16.gmra.mxu0 %v66
    %v106 = vpop.f32.mrf.mxu0
    %v107 = vadd.f32 %v44, %v106
    %v108 = vpop.f32.mrf.mxu0
    %v109 = vadd.f32 %v44, %v108
    %110 = vmatmul.bf16.gmra.mxu0 %v69
    %v111 = vpop.f32.mrf.mxu0
    %v112 = vadd.f32 %v44, %v111
    %v113 = vpop.f32.mrf.mxu0
    %v114 = vadd.f32 %v44, %v113
    %115 = vmatmul.bf16.gmra.mxu0 %v72
    %v116 = vpop.f32.mrf.mxu0
    %v117 = vadd.f32 %v44, %v116
    %v118 = vpop.f32.mrf.mxu0
    %v119 = vadd.f32 %v44, %v118
    %120 = vmatmul.bf16.gmra.mxu0 %v75
    %v121 = vpop.f32.mrf.mxu0
    %v122 = vadd.f32 %v44, %v121
    %v123 = vpop.f32.mrf.mxu0
    %v124 = vadd.f32 %v44, %v123
    %125 = vdwg.mxu0
    %v126 = vpack.c.bf16 %v87, %v87
    %v127 = vpack.c.bf16 %v89, %v89
    %v128 = vpack.c.bf16 %v92, %v92
    %v129 = vpack.c.bf16 %v94, %v94
    %v130 = vpack.c.bf16 %v97, %v97
    %v131 = vpack.c.bf16 %v99, %v99
    %v132 = vpack.c.bf16 %v102, %v102
    %v133 = vpack.c.bf16 %v104, %v104
    %v134 = vpack.c.bf16 %v107, %v107
    %v135 = vpack.c.bf16 %v109, %v109
    %v136 = vpack.c.bf16 %v112, %v112
    %v137 = vpack.c.bf16 %v114, %v114
    %v138 = vpack.c.bf16 %v117, %v117
    %v139 = vpack.c.bf16 %v119, %v119
    %v140 = vpack.c.bf16 %v122, %v122
    %v141 = vpack.c.bf16 %v124, %v124
    %142 = vst [vmem:[#allocation2] sm:$0xf] %v126
    %143 = vst [vmem:[#allocation2 + $0x4] sm:$0xf] %v127
    %144 = vst [vmem:[#allocation2 + $0x8] sm:$0xf] %v128
    %145 = vst [vmem:[#allocation2 + $0xc] sm:$0xf] %v129
    %146 = vst [vmem:[#allocation2 + $0x10] sm:$0xf] %v130
    %147 = vst [vmem:[#allocation2 + $0x14] sm:$0xf] %v131
    %148 = vst [vmem:[#allocation2 + $0x18] sm:$0xf] %v132
    %149 = vst [vmem:[#allocation2 + $0x1c] sm:$0xf] %v133
    %150 = vst [vmem:[#allocation2 + $0x20] sm:$0xf] %v134
    %151 = vst [vmem:[#allocation2 + $0x24] sm:$0xf] %v135
    %152 = vst [vmem:[#allocation2 + $0x28] sm:$0xf] %v136
    %153 = vst [vmem:[#allocation2 + $0x2c] sm:$0xf] %v137
    %154 = vst [vmem:[#allocation2 + $0x30] sm:$0xf] %v138
    %155 = vst [vmem:[#allocation2 + $0x34] sm:$0xf] %v139
    %156 = vst [vmem:[#allocation2 + $0x38] sm:$0xf] %v140
    %157 = vst [vmem:[#allocation2 + $0x3c] sm:$0xf] %v141
    // Predicated region
    $region14: #{tpu_custom_call.1} parent=1 // pred_check
      _
    $region15: #{tpu_custom_call.1} parent=1 // pred_check_branch
      %159 = sbr.rel (0) target = $region17
    $region16: #{tpu_custom_call.1} parent=1 // pred_region
      %161 = vsyncadd [#allocation3], 0
      %s162 = sshll.u32 [#allocation2], 4
      %s163 = int_to_ptr.vmem [resolvable:$true] %s162
      %s164 = sshll.u32 %s3, 4
      %s165 = int_to_ptr.hbm [resolvable:$true] %s164
      %170 = dma.vmem_to_hbm [thread:$0]  %s163, 1024, %s165, [#allocation3], 64, 64, 4
    $region17: #{tpu_custom_call.1} parent=1 // pred_fallthru
      _
    // Predicated region
    $region18: #{tpu_custom_call.1} parent=1 // pred_check
      _
    $region19: #{tpu_custom_call.1} parent=1 // pred_check_branch
      %172 = sbr.rel (0) target = $region21
    $region20: #{tpu_custom_call.1} parent=1 // pred_region
      %174 = dma.done [#allocation3], 1024
    $region21: #{tpu_custom_call.1} parent=1 // pred_fallthru
      _
    %175 = vsyncpa [#allocation3], 1

</llo_original>
